<compile_context>
chip_gen: v6e
topology: v6e:2x2x1
jax: 0.10.0
libtpu: 0.0.40
codegen_flags: <defaults>
</compile_context>

<pallas_src>
import functools

import jax
import jax.numpy as jnp
import numpy as np
from jax.experimental import pallas as pl
from jax.experimental.pallas import tpu as pltpu

LANE = 128            # TPU lane width; packed params / outputs padded to this
HALF = LANE // 2      # sin block sits exactly 64 lanes after the cos block
BN_EPS = 1e-5         # nn.BatchNorm1d default eps
VMEM = pl.BlockSpec(memory_space=pltpu.MemorySpace.VMEM)


# -----------------------------------------------------------------------------
# Single fused kernel
# -----------------------------------------------------------------------------
def _fused_kernel(sig_ref, feat_ref, dftw_ref, bnb_ref, out_ref,
                  *, B, nfft, w_off, m_hr, m_rr, n_layers):
    # ---- masked FFT power spectra: one (4B, L) x (L, 128) bf16 MXU matmul ---
    # sig rows: [0:B]=SCG-HR, [B:2B]=ECG-HR, [2B:3B]=SCG-RR, [3B:4B]=PPG-RR
    # dftw rows [0:L): DFT operator; cos block lanes [0,64), sin block [64,128)
    proj = jnp.dot(sig_ref[pl.ds(0, nfft + 0) if False else ...][0:0] if False
                   else sig_ref[...],
                   dftw_ref[pl.ds(0, nfft), :],
                   preferred_element_type=jnp.float32)              # (4B, 128)

    # |X_k|^2 = cos_proj^2 + sin_proj^2 ; sin lane = cos lane + 64 -> one roll.
    rolled = pltpu.roll(proj, HALF, 1)
    p = (2.0 / nfft) * (proj * proj + rolled * rolled)               # (4B, 128)

    col = jax.lax.broadcasted_iota(jnp.int32, (B, LANE), 1)
    hr_lanes = col < m_hr
    rr_lanes = jnp.logical_and(col >= m_hr, col < m_hr + m_rr)
    NEG = jnp.float32(-1e30)

    def masked_attention(power, lane_ok):
        z = jnp.where(lane_ok, power, NEG)
        m = jnp.max(z, axis=-1, keepdims=True)
        e = jnp.exp(z - m)                       # invalid lanes underflow to 0
        return e * pl.reciprocal(jnp.sum(e, axis=-1, keepdims=True), approx=True)

    # TODO(synk): attention_module class is not in the provided source;
    # synthetic attention = masked softmax over the attention signal's power.
    att_hr = masked_attention(p[B:2 * B], hr_lanes)
    x_fft_hr = jnp.sum(p[0:B] * att_hr, axis=-1, keepdims=True)      # (B, 1)
    att_rr = masked_attention(p[3 * B:4 * B], rr_lanes)
    x_fft_rr = jnp.sum(p[2 * B:3 * B] * att_rr, axis=-1, keepdims=True)

    # ---- concat_feature as a lane-dense 128-wide slab -----------------------
    # feature[:, :3] already sits in lanes 2..4 of feat_ref (wrapper layout);
    # the kernel only inserts the two x_fft lanes.
    h = feat_ref[...] + jnp.where(col == 0, x_fft_hr,
                                  jnp.where(col == 1, x_fft_rr, 0.0))
    concat128 = h                                                     # (B, 128)

    # ---- vanilla_regression: (n_layers-1) x [BN -> ReLU -> Linear] + Linear -
    # BatchNorm1d training-mode batch stats (biased variance), one-pass stats.
    for i in range(n_layers - 1):
        gb = bnb_ref[i]                         # (8, 128): [gamma; beta; bias]
        mean = jnp.mean(h, axis=0, keepdims=True)
        var = jnp.maximum(jnp.mean(h * h, axis=0, keepdims=True) - mean * mean,
                          0.0)
        hn = (h - mean) * jax.lax.rsqrt(var + BN_EPS)
        hn = jnp.maximum(hn * gb[0:1, :] + gb[1:2, :], 0.0)
        w_i = dftw_ref[pl.ds(w_off + i * LANE, LANE), :]   # (128, 128) bf16
        h = jnp.dot(hn.astype(jnp.bfloat16), w_i,
                    preferred_element_type=jnp.float32) + gb[2:3, :]
    last = n_layers - 1
    w_l = dftw_ref[pl.ds(w_off + last * LANE, LANE), :]
    out = jnp.dot(h.astype(jnp.bfloat16), w_l,
                  preferred_element_type=jnp.float32) + bnb_ref[last][2:3, :]

    # ---- packed lane-dense output: two direct stores (no concatenate) -------
    # rows [0:B)  = regressor output (cols >= num_classes are zero padding)
    # rows [B:2B) = concat_feature   (cols >= 5 are zero padding)
    out_ref[0:B, :] = out
    out_ref[B:2 * B, :] = concat128


# -----------------------------------------------------------------------------
# Wrapper: mirrors CardioRespRegression.forward(deep_feature, feature)
# -----------------------------------------------------------------------------
def cardioresp_forward(params, deep_feature, feature):
    B = feature.shape[0]
    order = ('SCG-HR_patch', 'ECG-HR_patch', 'SCG-RR_cosmed', 'PPG-RR_cosmed')
    # (B, 1, L) NCL -> (B, L); stack the four signals on the sublane axis so
    # the whole spectral stage is a single operand DMA and one MXU matmul.
    sigs = jnp.concatenate([deep_feature[k].reshape(B, -1) for k in order],
                           axis=0).astype(jnp.bfloat16)              # (4B, L)
    L = sigs.shape[-1]

    # Pre-place feature[:, :3] in lanes 2..4 of a lane-dense slab (lanes 0/1
    # reserved for x_fft_HR / x_fft_RR, filled in-kernel).
    feat128 = jnp.zeros((B, LANE), jnp.float32)
    feat128 = feat128.at[:, 2:2 + 3].set(
        feature.reshape(B, -1)[:, :3].astype(jnp.float32))

    n_layers = params['n_layers']
    kernel = functools.partial(
        _fused_kernel, B=B, nfft=L, w_off=params['w_off'],
        m_hr=params['m_hr'], m_rr=params['m_rr'], n_layers=n_layers)

    flops = 2 * (4 * B * L * LANE + n_layers * B * LANE * LANE)
    transcendentals = 2 * B * LANE + (n_layers - 1) * LANE
    bytes_accessed = (sigs.size * 2 + feat128.size * 4
                      + params['dftw'].size * 2 + params['bnb'].size * 4
                      + 2 * B * LANE * 4)

    packed = pl.pallas_call(
        kernel,
        out_shape=jax.ShapeDtypeStruct((2 * B, LANE), jnp.float32),
        in_specs=[VMEM] * 4,
        out_specs=VMEM,
        cost_estimate=pl.CostEstimate(flops=flops,
                                      transcendentals=transcendentals,
                                      bytes_accessed=bytes_accessed),
    )(sigs, feat128, params['dftw'], params['bnb'])

    out = packed[:B, :params['num_classes']]
    concat_feature = packed[B:, :params['concat_dim']]
    return out, concat_feature


# -----------------------------------------------------------------------------
# Deterministic synthetic parameters (the reference pulls them from
# training_params, which is not provided).  Everything is packed into two
# slabs: dftw (bf16: DFT operator + all MLP weights) and bnb (f32: gamma,
# beta, bias per layer, zero-padded to 8 sublanes).
# -----------------------------------------------------------------------------
def init_params(key, *, L, hr_mask, rr_mask, hidden=100, num_classes=1,
                n_layers=5):
    hr_bins = np.flatnonzero(np.asarray(hr_mask))
    rr_bins = np.flatnonzero(np.asarray(rr_mask))
    m_hr, m_rr = int(hr_bins.size), int(rr_bins.size)
    concat_dim = 2 + 3
    assert m_hr + m_rr <= HALF, "masked HR+RR bins must fit the 64-lane cos block"

    # Masked DFT operator: cos block lanes [0,64) (HR then RR), sin block
    # lanes [64,128) at exactly +64 from the matching cos lane.
    def dft_block(bins):
        n = np.arange(L, dtype=np.float64)[:, None]
        k = bins.astype(np.float64)[None, :]
        ang = 2.0 * np.pi * n * k / L
        return np.cos(ang), np.sin(ang)

    c_hr, s_hr = dft_block(hr_bins)
    c_rr, s_rr = dft_block(rr_bins)
    dft = np.zeros((L, LANE), np.float32)
    dft[:, 0:m_hr] = c_hr
    dft[:, m_hr:m_hr + m_rr] = c_rr
    dft[:, HALF:HALF + m_hr] = s_hr
    dft[:, HALF + m_hr:HALF + m_hr + m_rr] = s_rr

    # vanilla_regression params, zero-padded to 128 lanes.  Padded input rows,
    # output cols, gamma/beta and biases are zero, so padding is exact.
    keys = iter(jax.random.split(key, 4 * n_layers))
    w = np.zeros((n_layers, LANE, LANE), np.float32)
    bnb = np.zeros((n_layers, 8, LANE), np.float32)   # rows: gamma, beta, bias

    d_in = concat_dim
    for i in range(n_layers - 1):
        bnb[i, 0, :d_in] = 1.0 + 0.1 * np.asarray(
            jax.random.normal(next(keys), (d_in,), jnp.float32))
        bnb[i, 1, :d_in] = 0.1 * np.asarray(
            jax.random.normal(next(keys), (d_in,), jnp.float32))
        w[i, :d_in, :hidden] = (np.asarray(
            jax.random.normal(next(keys), (d_in, hidden), jnp.float32))
            / np.sqrt(d_in))
        bnb[i, 2, :hidden] = 0.1 * np.asarray(
            jax.random.normal(next(keys), (hidden,), jnp.float32))
        d_in = hidden
    w[n_layers - 1, :hidden, :num_classes] = (np.asarray(
        jax.random.normal(next(keys), (hidden, num_classes), jnp.float32))
        / np.sqrt(hidden))
    bnb[n_layers - 1, 2, :num_classes] = 0.1 * np.asarray(
        jax.random.normal(next(keys), (num_classes,), jnp.float32))

    # Pack [DFT ; W_0 ; ... ; W_{n-1}] into one bf16 slab; DFT block padded to
    # a multiple of 16 rows so every W_i slice is bf16-tile aligned.
    w_off = ((L + 15) // 16) * 16
    dftw = np.zeros((w_off + n_layers * LANE, LANE), np.float32)
    dftw[:L] = dft
    dftw[w_off:] = w.reshape(n_layers * LANE, LANE)

    return {
        'dftw': jnp.asarray(dftw, jnp.bfloat16),
        'bnb': jnp.asarray(bnb, jnp.float32),
        'w_off': w_off, 'm_hr': m_hr, 'm_rr': m_rr,
        'n_layers': n_layers, 'num_classes': num_classes,
        'concat_dim': concat_dim,
    }


# -----------------------------------------------------------------------------
# Pure-JAX reference for the spectral branch (uses a real f32 FFT) — validates
# the in-kernel DFT/mask/attention/concat path.
# -----------------------------------------------------------------------------
def _reference_concat_feature(deep_feature, feature, hr_bins, rr_bins):
    def masked_power(sig, bins):
        x = sig.reshape(sig.shape[0], -1)
        n = x.shape[-1]
        p = 2.0 / n * jnp.abs(jnp.fft.fft(x)[:, :n // 2]) ** 2
        return p[:, bins]

    p_scg_hr = masked_power(deep_feature['SCG-HR_patch'], hr_bins)
    att_hr = jax.nn.softmax(masked_power(deep_feature['ECG-HR_patch'], hr_bins), -1)
    x_hr = jnp.sum(p_scg_hr * att_hr, axis=-1, keepdims=True)
    p_scg_rr = masked_power(deep_feature['SCG-RR_cosmed'], rr_bins)
    att_rr = jax.nn.softmax(masked_power(deep_feature['PPG-RR_cosmed'], rr_bins), -1)
    x_rr = jnp.sum(p_scg_rr * att_rr, axis=-1, keepdims=True)
    feat = feature.reshape(feature.shape[0], -1)
    return jnp.concatenate([x_hr, x_rr, feat[:, :3]], axis=1)


if __name__ == "__main__":
    B = 2
    L = 64               # deep-feature length (NFFT); one-sided spectrum = 32 bins
    n_feature = 4
    num_classes = 1

    half = L // 2
    hr_mask = np.zeros(half, dtype=bool); hr_mask[4:20] = True    # 16 HR bins
    rr_mask = np.zeros(half, dtype=bool); rr_mask[2:10] = True    # 8 RR bins

    key = jax.random.PRNGKey(0)
    ks = jax.random.split(key, 6)
    deep_feature = {
        'SCG-HR_patch': jax.random.normal(ks[0], (B, 1, L), jnp.float32),
        'ECG-HR_patch': jax.random.normal(ks[1], (B, 1, L), jnp.float32),
        'SCG-RR_cosmed': jax.random.normal(ks[2], (B, 1, L), jnp.float32),
        'PPG-RR_cosmed': jax.random.normal(ks[3], (B, 1, L), jnp.float32),
    }
    feature = jax.random.normal(ks[4], (B, n_feature), jnp.float32)

    params = init_params(ks[5], L=L, hr_mask=hr_mask, rr_mask=rr_mask,
                         hidden=100, num_classes=num_classes)

    fwd = jax.jit(functools.partial(cardioresp_forward, params))
    out, concat_feature = fwd(deep_feature, feature)
    jax.block_until_ready((out, concat_feature))

    assert out.shape == (B, num_classes)
    assert concat_feature.shape == (B, 5)
    assert bool(jnp.all(jnp.isfinite(out)))
    assert bool(jnp.all(jnp.isfinite(concat_feature)))

    # Tolerance accounts for the bf16 MXU spectral path (signals + DFT operator
    # in bf16, f32 accumulation) versus the f32 jnp.fft reference.
    ref = _reference_concat_feature(deep_feature, feature,
                                    np.flatnonzero(hr_mask),
                                    np.flatnonzero(rr_mask))
    assert np.allclose(np.asarray(concat_feature), np.asarray(ref),
                       rtol=2e-1, atol=2e-1)

    print("KERNEL_OK")
</pallas_src>

<mosaic_0001>
module attributes {stable_mosaic.version = 11 : i64} {
  func.func @_fused_kernel(%arg0: memref<8x64xbf16, #tpu.memory_space<vmem>>, %arg1: memref<2x128xf32, #tpu.memory_space<vmem>>, %arg2: memref<704x128xbf16, #tpu.memory_space<vmem>>, %arg3: memref<5x8x128xf32, #tpu.memory_space<vmem>>, %arg4: memref<4x128xf32, #tpu.memory_space<vmem>>) attributes {dimension_semantics = [], scalar_prefetch = 0 : i64, scratch_operands = 0 : i64, tpu.core_type = #tpu.core_type<tc>} {
    %c0 = arith.constant 0 : index
    %c0_0 = arith.constant 0 : index
    %0 = vector.load %arg0[%c0, %c0_0] : memref<8x64xbf16, #tpu.memory_space<vmem>>, vector<8x64xbf16>
    %c0_1 = arith.constant 0 : index
    %c0_2 = arith.constant 0 : index
    %1 = vector.load %arg2[%c0_1, %c0_2] : memref<704x128xbf16, #tpu.memory_space<vmem>>, vector<64x128xbf16>
    %cst = arith.constant dense<0.000000e+00> : vector<8x128xf32>
    %2 = tpu.matmul %0, %1, %cst {dimension_numbers = #tpu.dot_dimension_numbers<[1], [0], [0], [1], [0, 0, 1, 1], [], []>} : vector<8x64xbf16>, vector<64x128xbf16>, vector<8x128xf32> -> vector<8x128xf32>
    %c64_i32 = arith.constant 64 : i32
    %3 = tpu.dynamic_rotate %2 by %c64_i32 dim 1 : vector<8x128xf32>, i32 -> vector<8x128xf32>
    %4 = arith.mulf %2, %2 : vector<8x128xf32>
    %5 = arith.mulf %3, %3 : vector<8x128xf32>
    %6 = arith.addf %4, %5 : vector<8x128xf32>
    %cst_3 = arith.constant 3.125000e-02 : f32
    %7 = vector.broadcast %cst_3 : f32 to vector<8x128xf32>
    %8 = arith.mulf %7, %6 : vector<8x128xf32>
    %9 = tpu.iota {dimensions = array<i32: 1>} : vector<2x128xi32>
    %c16_i32 = arith.constant 16 : i32
    %10 = vector.broadcast %c16_i32 : i32 to vector<2x128xi32>
    %11 = arith.cmpi slt, %9, %10 : vector<2x128xi32>
    %c16_i32_4 = arith.constant 16 : i32
    %12 = vector.broadcast %c16_i32_4 : i32 to vector<2x128xi32>
    %13 = arith.cmpi sge, %9, %12 : vector<2x128xi32>
    %c24_i32 = arith.constant 24 : i32
    %14 = vector.broadcast %c24_i32 : i32 to vector<2x128xi32>
    %15 = arith.cmpi slt, %9, %14 : vector<2x128xi32>
    %16 = arith.andi %13, %15 : vector<2x128xi1>
    %17 = vector.extract_strided_slice %8 {offsets = [2, 0], sizes = [2, 128], strides = [1, 1]} : vector<8x128xf32> to vector<2x128xf32>
    %cst_5 = arith.constant -1.000000e+30 : f32
    %18 = vector.broadcast %cst_5 : f32 to vector<2x128xf32>
    %19 = arith.select %11, %17, %18 : vector<2x128xi1>, vector<2x128xf32>
    %cst_6 = arith.constant dense<0xFF800000> : vector<2xf32>
    %20 = vector.multi_reduction <maximumf>, %19, %cst_6 [1] : vector<2x128xf32> to vector<2xf32>
    %21 = vector.shape_cast %20 : vector<2xf32> to vector<2x1xf32>
    %22 = vector.broadcast %21 : vector<2x1xf32> to vector<2x128xf32>
    %23 = arith.subf %19, %22 : vector<2x128xf32>
    %24 = math.exp %23 : vector<2x128xf32>
    %cst_7 = arith.constant dense<0.000000e+00> : vector<2xf32>
    %25 = vector.multi_reduction <add>, %24, %cst_7 [1] : vector<2x128xf32> to vector<2xf32>
    %26 = vector.shape_cast %25 : vector<2xf32> to vector<2x1xf32>
    %27 = tpu.reciprocal %26 {approx = true} : vector<2x1xf32> -> vector<2x1xf32>
    %28 = vector.broadcast %27 : vector<2x1xf32> to vector<2x128xf32>
    %29 = arith.mulf %24, %28 : vector<2x128xf32>
    %30 = vector.extract_strided_slice %8 {offsets = [0, 0], sizes = [2, 128], strides = [1, 1]} : vector<8x128xf32> to vector<2x128xf32>
    %31 = arith.mulf %30, %29 : vector<2x128xf32>
    %cst_8 = arith.constant dense<0.000000e+00> : vector<2xf32>
    %32 = vector.multi_reduction <add>, %31, %cst_8 [1] : vector<2x128xf32> to vector<2xf32>
    %33 = vector.shape_cast %32 : vector<2xf32> to vector<2x1xf32>
    %34 = vector.extract_strided_slice %8 {offsets = [6, 0], sizes = [2, 128], strides = [1, 1]} : vector<8x128xf32> to vector<2x128xf32>
    %cst_9 = arith.constant -1.000000e+30 : f32
    %35 = vector.broadcast %cst_9 : f32 to vector<2x128xf32>
    %36 = arith.select %16, %34, %35 : vector<2x128xi1>, vector<2x128xf32>
    %cst_10 = arith.constant dense<0xFF800000> : vector<2xf32>
    %37 = vector.multi_reduction <maximumf>, %36, %cst_10 [1] : vector<2x128xf32> to vector<2xf32>
    %38 = vector.shape_cast %37 : vector<2xf32> to vector<2x1xf32>
    %39 = vector.broadcast %38 : vector<2x1xf32> to vector<2x128xf32>
    %40 = arith.subf %36, %39 : vector<2x128xf32>
    %41 = math.exp %40 : vector<2x128xf32>
    %cst_11 = arith.constant dense<0.000000e+00> : vector<2xf32>
    %42 = vector.multi_reduction <add>, %41, %cst_11 [1] : vector<2x128xf32> to vector<2xf32>
    %43 = vector.shape_cast %42 : vector<2xf32> to vector<2x1xf32>
    %44 = tpu.reciprocal %43 {approx = true} : vector<2x1xf32> -> vector<2x1xf32>
    %45 = vector.broadcast %44 : vector<2x1xf32> to vector<2x128xf32>
    %46 = arith.mulf %41, %45 : vector<2x128xf32>
    %47 = vector.extract_strided_slice %8 {offsets = [4, 0], sizes = [2, 128], strides = [1, 1]} : vector<8x128xf32> to vector<2x128xf32>
    %48 = arith.mulf %47, %46 : vector<2x128xf32>
    %cst_12 = arith.constant dense<0.000000e+00> : vector<2xf32>
    %49 = vector.multi_reduction <add>, %48, %cst_12 [1] : vector<2x128xf32> to vector<2xf32>
    %50 = vector.shape_cast %49 : vector<2xf32> to vector<2x1xf32>
    %c0_13 = arith.constant 0 : index
    %c0_14 = arith.constant 0 : index
    %51 = vector.load %arg1[%c0_13, %c0_14] : memref<2x128xf32, #tpu.memory_space<vmem>>, vector<2x128xf32>
    %c0_i32 = arith.constant 0 : i32
    %52 = vector.broadcast %c0_i32 : i32 to vector<2x128xi32>
    %53 = arith.cmpi eq, %9, %52 : vector<2x128xi32>
    %c1_i32 = arith.constant 1 : i32
    %54 = vector.broadcast %c1_i32 : i32 to vector<2x128xi32>
    %55 = arith.cmpi eq, %9, %54 : vector<2x128xi32>
    %cst_15 = arith.constant 0.000000e+00 : f32
    %56 = vector.shape_cast %50 : vector<2x1xf32> to vector<2x1xf32>
    %57 = vector.broadcast %56 : vector<2x1xf32> to vector<2x128xf32>
    %58 = vector.broadcast %cst_15 : f32 to vector<2x128xf32>
    %59 = arith.select %55, %57, %58 : vector<2x128xi1>, vector<2x128xf32>
    %60 = vector.shape_cast %33 : vector<2x1xf32> to vector<2x1xf32>
    %61 = vector.broadcast %60 : vector<2x1xf32> to vector<2x128xf32>
    %62 = arith.select %53, %61, %59 : vector<2x128xi1>, vector<2x128xf32>
    %63 = arith.addf %51, %62 : vector<2x128xf32>
    %c0_16 = arith.constant 0 : index
    %c0_17 = arith.constant 0 : index
    %c0_18 = arith.constant 0 : index
    %64 = vector.load %arg3[%c0_16, %c0_17, %c0_18] : memref<5x8x128xf32, #tpu.memory_space<vmem>>, vector<1x8x128xf32>
    %65 = vector.shape_cast %64 : vector<1x8x128xf32> to vector<8x128xf32>
    %cst_19 = arith.constant dense<0.000000e+00> : vector<128xf32>
    %66 = vector.multi_reduction <add>, %63, %cst_19 [0] : vector<2x128xf32> to vector<128xf32>
    %67 = vector.shape_cast %66 : vector<128xf32> to vector<1x128xf32>
    %cst_20 = arith.constant 2.000000e+00 : f32
    %68 = vector.broadcast %cst_20 : f32 to vector<1x128xf32>
    %69 = arith.divf %67, %68 : vector<1x128xf32>
    %70 = arith.mulf %63, %63 : vector<2x128xf32>
    %cst_21 = arith.constant dense<0.000000e+00> : vector<128xf32>
    %71 = vector.multi_reduction <add>, %70, %cst_21 [0] : vector<2x128xf32> to vector<128xf32>
    %72 = vector.shape_cast %71 : vector<128xf32> to vector<1x128xf32>
    %cst_22 = arith.constant 2.000000e+00 : f32
    %73 = vector.broadcast %cst_22 : f32 to vector<1x128xf32>
    %74 = arith.divf %72, %73 : vector<1x128xf32>
    %75 = arith.mulf %69, %69 : vector<1x128xf32>
    %76 = arith.subf %74, %75 : vector<1x128xf32>
    %cst_23 = arith.constant 0.000000e+00 : f32
    %77 = vector.broadcast %cst_23 : f32 to vector<1x128xf32>
    %78 = arith.maximumf %76, %77 : vector<1x128xf32>
    %79 = vector.broadcast %69 : vector<1x128xf32> to vector<2x128xf32>
    %80 = arith.subf %63, %79 : vector<2x128xf32>
    %cst_24 = arith.constant 9.99999974E-6 : f32
    %81 = vector.broadcast %cst_24 : f32 to vector<1x128xf32>
    %82 = arith.addf %78, %81 : vector<1x128xf32>
    %83 = math.rsqrt %82 : vector<1x128xf32>
    %84 = vector.broadcast %83 : vector<1x128xf32> to vector<2x128xf32>
    %85 = arith.mulf %80, %84 : vector<2x128xf32>
    %86 = vector.extract_strided_slice %65 {offsets = [0, 0], sizes = [1, 128], strides = [1, 1]} : vector<8x128xf32> to vector<1x128xf32>
    %87 = vector.broadcast %86 : vector<1x128xf32> to vector<2x128xf32>
    %88 = arith.mulf %85, %87 : vector<2x128xf32>
    %89 = vector.extract_strided_slice %65 {offsets = [1, 0], sizes = [1, 128], strides = [1, 1]} : vector<8x128xf32> to vector<1x128xf32>
    %90 = vector.broadcast %89 : vector<1x128xf32> to vector<2x128xf32>
    %91 = arith.addf %88, %90 : vector<2x128xf32>
    %cst_25 = arith.constant 0.000000e+00 : f32
    %92 = vector.broadcast %cst_25 : f32 to vector<2x128xf32>
    %93 = arith.maximumf %91, %92 : vector<2x128xf32>
    %c64 = arith.constant 64 : index
    %c0_26 = arith.constant 0 : index
    %94 = vector.load %arg2[%c64, %c0_26] : memref<704x128xbf16, #tpu.memory_space<vmem>>, vector<128x128xbf16>
    %95 = arith.truncf %93 : vector<2x128xf32> to vector<2x128xbf16>
    %cst_27 = arith.constant dense<0.000000e+00> : vector<2x128xf32>
    %96 = tpu.matmul %95, %94, %cst_27 {dimension_numbers = #tpu.dot_dimension_numbers<[1], [0], [0], [1], [0, 0, 1, 1], [], []>} : vector<2x128xbf16>, vector<128x128xbf16>, vector<2x128xf32> -> vector<2x128xf32>
    %97 = vector.extract_strided_slice %65 {offsets = [2, 0], sizes = [1, 128], strides = [1, 1]} : vector<8x128xf32> to vector<1x128xf32>
    %98 = vector.broadcast %97 : vector<1x128xf32> to vector<2x128xf32>
    %99 = arith.addf %96, %98 : vector<2x128xf32>
    %c1 = arith.constant 1 : index
    %c0_28 = arith.constant 0 : index
    %c0_29 = arith.constant 0 : index
    %100 = vector.load %arg3[%c1, %c0_28, %c0_29] : memref<5x8x128xf32, #tpu.memory_space<vmem>>, vector<1x8x128xf32>
    %101 = vector.shape_cast %100 : vector<1x8x128xf32> to vector<8x128xf32>
    %cst_30 = arith.constant dense<0.000000e+00> : vector<128xf32>
    %102 = vector.multi_reduction <add>, %99, %cst_30 [0] : vector<2x128xf32> to vector<128xf32>
    %103 = vector.shape_cast %102 : vector<128xf32> to vector<1x128xf32>
    %cst_31 = arith.constant 2.000000e+00 : f32
    %104 = vector.broadcast %cst_31 : f32 to vector<1x128xf32>
    %105 = arith.divf %103, %104 : vector<1x128xf32>
    %106 = arith.mulf %99, %99 : vector<2x128xf32>
    %cst_32 = arith.constant dense<0.000000e+00> : vector<128xf32>
    %107 = vector.multi_reduction <add>, %106, %cst_32 [0] : vector<2x128xf32> to vector<128xf32>
    %108 = vector.shape_cast %107 : vector<128xf32> to vector<1x128xf32>
    %cst_33 = arith.constant 2.000000e+00 : f32
    %109 = vector.broadcast %cst_33 : f32 to vector<1x128xf32>
    %110 = arith.divf %108, %109 : vector<1x128xf32>
    %111 = arith.mulf %105, %105 : vector<1x128xf32>
    %112 = arith.subf %110, %111 : vector<1x128xf32>
    %cst_34 = arith.constant 0.000000e+00 : f32
    %113 = vector.broadcast %cst_34 : f32 to vector<1x128xf32>
    %114 = arith.maximumf %112, %113 : vector<1x128xf32>
    %115 = vector.broadcast %105 : vector<1x128xf32> to vector<2x128xf32>
    %116 = arith.subf %99, %115 : vector<2x128xf32>
    %cst_35 = arith.constant 9.99999974E-6 : f32
    %117 = vector.broadcast %cst_35 : f32 to vector<1x128xf32>
    %118 = arith.addf %114, %117 : vector<1x128xf32>
    %119 = math.rsqrt %118 : vector<1x128xf32>
    %120 = vector.broadcast %119 : vector<1x128xf32> to vector<2x128xf32>
    %121 = arith.mulf %116, %120 : vector<2x128xf32>
    %122 = vector.extract_strided_slice %101 {offsets = [0, 0], sizes = [1, 128], strides = [1, 1]} : vector<8x128xf32> to vector<1x128xf32>
    %123 = vector.broadcast %122 : vector<1x128xf32> to vector<2x128xf32>
    %124 = arith.mulf %121, %123 : vector<2x128xf32>
    %125 = vector.extract_strided_slice %101 {offsets = [1, 0], sizes = [1, 128], strides = [1, 1]} : vector<8x128xf32> to vector<1x128xf32>
    %126 = vector.broadcast %125 : vector<1x128xf32> to vector<2x128xf32>
    %127 = arith.addf %124, %126 : vector<2x128xf32>
    %cst_36 = arith.constant 0.000000e+00 : f32
    %128 = vector.broadcast %cst_36 : f32 to vector<2x128xf32>
    %129 = arith.maximumf %127, %128 : vector<2x128xf32>
    %c192 = arith.constant 192 : index
    %c0_37 = arith.constant 0 : index
    %130 = vector.load %arg2[%c192, %c0_37] : memref<704x128xbf16, #tpu.memory_space<vmem>>, vector<128x128xbf16>
    %131 = arith.truncf %129 : vector<2x128xf32> to vector<2x128xbf16>
    %cst_38 = arith.constant dense<0.000000e+00> : vector<2x128xf32>
    %132 = tpu.matmul %131, %130, %cst_38 {dimension_numbers = #tpu.dot_dimension_numbers<[1], [0], [0], [1], [0, 0, 1, 1], [], []>} : vector<2x128xbf16>, vector<128x128xbf16>, vector<2x128xf32> -> vector<2x128xf32>
    %133 = vector.extract_strided_slice %101 {offsets = [2, 0], sizes = [1, 128], strides = [1, 1]} : vector<8x128xf32> to vector<1x128xf32>
    %134 = vector.broadcast %133 : vector<1x128xf32> to vector<2x128xf32>
    %135 = arith.addf %132, %134 : vector<2x128xf32>
    %c2 = arith.constant 2 : index
    %c0_39 = arith.constant 0 : index
    %c0_40 = arith.constant 0 : index
    %136 = vector.load %arg3[%c2, %c0_39, %c0_40] : memref<5x8x128xf32, #tpu.memory_space<vmem>>, vector<1x8x128xf32>
    %137 = vector.shape_cast %136 : vector<1x8x128xf32> to vector<8x128xf32>
    %cst_41 = arith.constant dense<0.000000e+00> : vector<128xf32>
    %138 = vector.multi_reduction <add>, %135, %cst_41 [0] : vector<2x128xf32> to vector<128xf32>
    %139 = vector.shape_cast %138 : vector<128xf32> to vector<1x128xf32>
    %cst_42 = arith.constant 2.000000e+00 : f32
    %140 = vector.broadcast %cst_42 : f32 to vector<1x128xf32>
    %141 = arith.divf %139, %140 : vector<1x128xf32>
    %142 = arith.mulf %135, %135 : vector<2x128xf32>
    %cst_43 = arith.constant dense<0.000000e+00> : vector<128xf32>
    %143 = vector.multi_reduction <add>, %142, %cst_43 [0] : vector<2x128xf32> to vector<128xf32>
    %144 = vector.shape_cast %143 : vector<128xf32> to vector<1x128xf32>
    %cst_44 = arith.constant 2.000000e+00 : f32
    %145 = vector.broadcast %cst_44 : f32 to vector<1x128xf32>
    %146 = arith.divf %144, %145 : vector<1x128xf32>
    %147 = arith.mulf %141, %141 : vector<1x128xf32>
    %148 = arith.subf %146, %147 : vector<1x128xf32>
    %cst_45 = arith.constant 0.000000e+00 : f32
    %149 = vector.broadcast %cst_45 : f32 to vector<1x128xf32>
    %150 = arith.maximumf %148, %149 : vector<1x128xf32>
    %151 = vector.broadcast %141 : vector<1x128xf32> to vector<2x128xf32>
    %152 = arith.subf %135, %151 : vector<2x128xf32>
    %cst_46 = arith.constant 9.99999974E-6 : f32
    %153 = vector.broadcast %cst_46 : f32 to vector<1x128xf32>
    %154 = arith.addf %150, %153 : vector<1x128xf32>
    %155 = math.rsqrt %154 : vector<1x128xf32>
    %156 = vector.broadcast %155 : vector<1x128xf32> to vector<2x128xf32>
    %157 = arith.mulf %152, %156 : vector<2x128xf32>
    %158 = vector.extract_strided_slice %137 {offsets = [0, 0], sizes = [1, 128], strides = [1, 1]} : vector<8x128xf32> to vector<1x128xf32>
    %159 = vector.broadcast %158 : vector<1x128xf32> to vector<2x128xf32>
    %160 = arith.mulf %157, %159 : vector<2x128xf32>
    %161 = vector.extract_strided_slice %137 {offsets = [1, 0], sizes = [1, 128], strides = [1, 1]} : vector<8x128xf32> to vector<1x128xf32>
    %162 = vector.broadcast %161 : vector<1x128xf32> to vector<2x128xf32>
    %163 = arith.addf %160, %162 : vector<2x128xf32>
    %cst_47 = arith.constant 0.000000e+00 : f32
    %164 = vector.broadcast %cst_47 : f32 to vector<2x128xf32>
    %165 = arith.maximumf %163, %164 : vector<2x128xf32>
    %c320 = arith.constant 320 : index
    %c0_48 = arith.constant 0 : index
    %166 = vector.load %arg2[%c320, %c0_48] : memref<704x128xbf16, #tpu.memory_space<vmem>>, vector<128x128xbf16>
    %167 = arith.truncf %165 : vector<2x128xf32> to vector<2x128xbf16>
    %cst_49 = arith.constant dense<0.000000e+00> : vector<2x128xf32>
    %168 = tpu.matmul %167, %166, %cst_49 {dimension_numbers = #tpu.dot_dimension_numbers<[1], [0], [0], [1], [0, 0, 1, 1], [], []>} : vector<2x128xbf16>, vector<128x128xbf16>, vector<2x128xf32> -> vector<2x128xf32>
    %169 = vector.extract_strided_slice %137 {offsets = [2, 0], sizes = [1, 128], strides = [1, 1]} : vector<8x128xf32> to vector<1x128xf32>
    %170 = vector.broadcast %169 : vector<1x128xf32> to vector<2x128xf32>
    %171 = arith.addf %168, %170 : vector<2x128xf32>
    %c3 = arith.constant 3 : index
    %c0_50 = arith.constant 0 : index
    %c0_51 = arith.constant 0 : index
    %172 = vector.load %arg3[%c3, %c0_50, %c0_51] : memref<5x8x128xf32, #tpu.memory_space<vmem>>, vector<1x8x128xf32>
    %173 = vector.shape_cast %172 : vector<1x8x128xf32> to vector<8x128xf32>
    %cst_52 = arith.constant dense<0.000000e+00> : vector<128xf32>
    %174 = vector.multi_reduction <add>, %171, %cst_52 [0] : vector<2x128xf32> to vector<128xf32>
    %175 = vector.shape_cast %174 : vector<128xf32> to vector<1x128xf32>
    %cst_53 = arith.constant 2.000000e+00 : f32
    %176 = vector.broadcast %cst_53 : f32 to vector<1x128xf32>
    %177 = arith.divf %175, %176 : vector<1x128xf32>
    %178 = arith.mulf %171, %171 : vector<2x128xf32>
    %cst_54 = arith.constant dense<0.000000e+00> : vector<128xf32>
    %179 = vector.multi_reduction <add>, %178, %cst_54 [0] : vector<2x128xf32> to vector<128xf32>
    %180 = vector.shape_cast %179 : vector<128xf32> to vector<1x128xf32>
    %cst_55 = arith.constant 2.000000e+00 : f32
    %181 = vector.broadcast %cst_55 : f32 to vector<1x128xf32>
    %182 = arith.divf %180, %181 : vector<1x128xf32>
    %183 = arith.mulf %177, %177 : vector<1x128xf32>
    %184 = arith.subf %182, %183 : vector<1x128xf32>
    %cst_56 = arith.constant 0.000000e+00 : f32
    %185 = vector.broadcast %cst_56 : f32 to vector<1x128xf32>
    %186 = arith.maximumf %184, %185 : vector<1x128xf32>
    %187 = vector.broadcast %177 : vector<1x128xf32> to vector<2x128xf32>
    %188 = arith.subf %171, %187 : vector<2x128xf32>
    %cst_57 = arith.constant 9.99999974E-6 : f32
    %189 = vector.broadcast %cst_57 : f32 to vector<1x128xf32>
    %190 = arith.addf %186, %189 : vector<1x128xf32>
    %191 = math.rsqrt %190 : vector<1x128xf32>
    %192 = vector.broadcast %191 : vector<1x128xf32> to vector<2x128xf32>
    %193 = arith.mulf %188, %192 : vector<2x128xf32>
    %194 = vector.extract_strided_slice %173 {offsets = [0, 0], sizes = [1, 128], strides = [1, 1]} : vector<8x128xf32> to vector<1x128xf32>
    %195 = vector.broadcast %194 : vector<1x128xf32> to vector<2x128xf32>
    %196 = arith.mulf %193, %195 : vector<2x128xf32>
    %197 = vector.extract_strided_slice %173 {offsets = [1, 0], sizes = [1, 128], strides = [1, 1]} : vector<8x128xf32> to vector<1x128xf32>
    %198 = vector.broadcast %197 : vector<1x128xf32> to vector<2x128xf32>
    %199 = arith.addf %196, %198 : vector<2x128xf32>
    %cst_58 = arith.constant 0.000000e+00 : f32
    %200 = vector.broadcast %cst_58 : f32 to vector<2x128xf32>
    %201 = arith.maximumf %199, %200 : vector<2x128xf32>
    %c448 = arith.constant 448 : index
    %c0_59 = arith.constant 0 : index
    %202 = vector.load %arg2[%c448, %c0_59] : memref<704x128xbf16, #tpu.memory_space<vmem>>, vector<128x128xbf16>
    %203 = arith.truncf %201 : vector<2x128xf32> to vector<2x128xbf16>
    %cst_60 = arith.constant dense<0.000000e+00> : vector<2x128xf32>
    %204 = tpu.matmul %203, %202, %cst_60 {dimension_numbers = #tpu.dot_dimension_numbers<[1], [0], [0], [1], [0, 0, 1, 1], [], []>} : vector<2x128xbf16>, vector<128x128xbf16>, vector<2x128xf32> -> vector<2x128xf32>
    %205 = vector.extract_strided_slice %173 {offsets = [2, 0], sizes = [1, 128], strides = [1, 1]} : vector<8x128xf32> to vector<1x128xf32>
    %206 = vector.broadcast %205 : vector<1x128xf32> to vector<2x128xf32>
    %207 = arith.addf %204, %206 : vector<2x128xf32>
    %c576 = arith.constant 576 : index
    %c0_61 = arith.constant 0 : index
    %208 = vector.load %arg2[%c576, %c0_61] : memref<704x128xbf16, #tpu.memory_space<vmem>>, vector<128x128xbf16>
    %209 = arith.truncf %207 : vector<2x128xf32> to vector<2x128xbf16>
    %cst_62 = arith.constant dense<0.000000e+00> : vector<2x128xf32>
    %210 = tpu.matmul %209, %208, %cst_62 {dimension_numbers = #tpu.dot_dimension_numbers<[1], [0], [0], [1], [0, 0, 1, 1], [], []>} : vector<2x128xbf16>, vector<128x128xbf16>, vector<2x128xf32> -> vector<2x128xf32>
    %c4 = arith.constant 4 : index
    %c0_63 = arith.constant 0 : index
    %c0_64 = arith.constant 0 : index
    %211 = vector.load %arg3[%c4, %c0_63, %c0_64] : memref<5x8x128xf32, #tpu.memory_space<vmem>>, vector<1x8x128xf32>
    %212 = vector.shape_cast %211 : vector<1x8x128xf32> to vector<8x128xf32>
    %213 = vector.extract_strided_slice %212 {offsets = [2, 0], sizes = [1, 128], strides = [1, 1]} : vector<8x128xf32> to vector<1x128xf32>
    %214 = vector.broadcast %213 : vector<1x128xf32> to vector<2x128xf32>
    %215 = arith.addf %210, %214 : vector<2x128xf32>
    %c0_65 = arith.constant 0 : index
    %c0_66 = arith.constant 0 : index
    %216 = vector.load %arg4[%c0_65, %c0_66] : memref<4x128xf32, #tpu.memory_space<vmem>>, vector<2x128xf32>
    tpu.vector_store %arg4[%c0_65, %c0_66], %215 {strides = array<i32>} : memref<4x128xf32, #tpu.memory_space<vmem>>, vector<2x128xf32>,
    %c2_67 = arith.constant 2 : index
    %c0_68 = arith.constant 0 : index
    %217 = vector.load %arg4[%c2_67, %c0_68] : memref<4x128xf32, #tpu.memory_space<vmem>>, vector<2x128xf32>
    tpu.vector_store %arg4[%c2_67, %c0_68], %63 {strides = array<i32>} : memref<4x128xf32, #tpu.memory_space<vmem>>, vector<2x128xf32>,
    return
  }
}

</mosaic_0001>

<llo_original>
// kernel: cardioresp_forward.1
$region0: #{cardioresp_forward.1}
  #allocation0 [shape = 'u32[]', space=smem, size = 0x4, offset = 0x4, fixed_abs, tag = 'smem constant byte address 0x4 - core index']
  #allocation1 [shape = 'u32[144,128]{1,0:T(1,128)}', space=vmem, size = 0x12000, scoped, tag = 'internal scratch']
  %s0 = inlined_call_operand.vmem [shape: bf16[8,64], index: 0, kind: input, shape index: {}]
  %s1 = inlined_call_operand.vmem [shape: f32[2,128], index: 1, kind: input, shape index: {}]
  %s2 = inlined_call_operand.hbm [shape: bf16[704,128], index: 2, kind: input, shape index: {}]
  %s3 = inlined_call_operand.vmem [shape: f32[5,8,128], index: 3, kind: input, shape index: {}]
  %s4 = inlined_call_operand.vmem [shape: f32[4,128], index: 4, kind: output, shape index: {}]
  %s5 = sld [smem:[#allocation0]]
  $region30: #{cardioresp_forward.1} parent=0
    _
  %s7 = ssub.s32 1, %s5
  %s8 = scalar_select 0, %s7, %s5
  $region1: #{cardioresp_forward.1} parent=0
    #allocation2 [shape = 'u8[180224]{0}', space=vmem, size = 0x2c000, scoped, tag = 'input window, operand 2, single buffered']
    #allocation3 [shape = 's32[1]{0}', space=sflag, size = 0x4, scoped, tag = 'scoped memory for cardioresp_forward.1']
    %9 = vsyncpa [#allocation3], 0
    // Predicated region
    $region2: #{cardioresp_forward.1} parent=1 // pred_check
      _
    $region3: #{cardioresp_forward.1} parent=1 // pred_check_branch
      %11 = sbr.rel (0) target = $region5
    $region4: #{cardioresp_forward.1} parent=1 // pred_region
      _
    $region5: #{cardioresp_forward.1} parent=1 // pred_fallthru
      _
    // Predicated region
    $region6: #{cardioresp_forward.1} parent=1 // pred_check
      _
    $region7: #{cardioresp_forward.1} parent=1 // pred_check_branch
      %13 = sbr.rel (0) target = $region9
    $region8: #{cardioresp_forward.1} parent=1 // pred_region
      _
    $region9: #{cardioresp_forward.1} parent=1 // pred_fallthru
      _
    // Predicated region
    $region10: #{cardioresp_forward.1} parent=1 // pred_check
      _
    $region11: #{cardioresp_forward.1} parent=1 // pred_check_branch
      %15 = sbr.rel (0) target = $region13
    $region12: #{cardioresp_forward.1} parent=1 // pred_region
      %s17 = ssub.s32 5632, 5632
      %18 = vsyncadd [#allocation3], %s17
      %s19 = sshll.u32 [#allocation2], 4
      %s20 = int_to_ptr.vmem [resolvable:$true] %s19
      %25 = dma.hbm_to_vmem [thread:$0]  %s2, 5632, %s20, [#allocation3], 64, 64, 4
    $region13: #{cardioresp_forward.1} parent=1 // pred_fallthru
      _
    // Predicated region
    $region14: #{cardioresp_forward.1} parent=1 // pred_check
      _
    $region15: #{cardioresp_forward.1} parent=1 // pred_check_branch
      %27 = sbr.rel (0) target = $region17
    $region16: #{cardioresp_forward.1} parent=1 // pred_region
      _
    $region17: #{cardioresp_forward.1} parent=1 // pred_fallthru
      _
    // Predicated region
    $region18: #{cardioresp_forward.1} parent=1 // pred_check
      _
    $region19: #{cardioresp_forward.1} parent=1 // pred_check_branch
      %29 = sbr.rel (0) target = $region21
    $region20: #{cardioresp_forward.1} parent=1 // pred_region
      %30 = dma.done [#allocation3], 5632
    $region21: #{cardioresp_forward.1} parent=1 // pred_fallthru
      _
    %v32 = vld [vmem:[%s0] sm:$0xf]
    %v33 = vld [vmem:[#allocation2] sm:$0xf]
    %v34 = vld [vmem:[#allocation2 + $0x4] sm:$0xf]
    %v35 = vld [vmem:[#allocation2 + $0x8] sm:$0xf]
    %v36 = vld [vmem:[#allocation2 + $0xc] sm:$0xf]
    %v37 = vld [vmem:[#allocation2 + $0x10] sm:$0xf]
    %v38 = vld [vmem:[#allocation2 + $0x14] sm:$0xf]
    %v39 = vld [vmem:[#allocation2 + $0x18] sm:$0xf]
    %v40 = vld [vmem:[#allocation2 + $0x1c] sm:$0xf]
    %v49 = vunpack.c.l.b16 %v33
    %v50 = vunpack.c.l.b16 %v34
    %v51 = vunpack.c.l.b16 %v35
    %v52 = vunpack.c.l.b16 %v36
    %v53 = vunpack.c.l.b16 %v37
    %v54 = vunpack.c.l.b16 %v38
    %v55 = vunpack.c.l.b16 %v39
    %v56 = vunpack.c.l.b16 %v40
    %v57 = vpack.c.b16 %v50, %v49
    %v58 = vpack.c.b16 %v52, %v51
    %v59 = vpack.c.b16 %v54, %v53
    %v60 = vpack.c.b16 %v56, %v55
    %vm65 = vcmask 523264
    %v67 = vsel %vm65, %v32, 0
    %69 = vmatprep.subr.bf16.mxu0 0
    %70 = vmatpush1.bf16.msra.mxu0 0
    %71 = vmatprep.subr.bf16.mxu0 0
    %72 = vmatpush1.bf16.msra.mxu0 0
    %73 = vmatprep.subr.bf16.mxu0 0
    %74 = vmatpush1.bf16.msra.mxu0 0
    %75 = vmatprep.subr.bf16.mxu0 0
    %76 = vmatpush1.bf16.msra.mxu0 0
    %77 = vmatprep.subr.bf16.mxu0 0
    %78 = vmatpush1.bf16.msra.mxu0 %v60
    %79 = vmatprep.subr.bf16.mxu0 0
    %80 = vmatpush1.bf16.msra.mxu0 %v59
    %81 = vmatprep.subr.bf16.mxu0 0
    %82 = vmatpush1.bf16.msra.mxu0 %v58
    %83 = vmatprep.subr.bf16.mxu0 0
    %84 = vmatpush1.bf16.msra.mxu0 %v57
    %85 = vmatprep.subr.bf16.mxu0 0
    %86 = vmatpush2.bf16.msra.mxu0 0
    %87 = vmatprep.subr.bf16.mxu0 0
    %88 = vmatpush2.bf16.msra.mxu0 0
    %89 = vmatprep.subr.bf16.mxu0 0
    %90 = vmatpush2.bf16.msra.mxu0 0
    %91 = vmatprep.subr.bf16.mxu0 0
    %92 = vmatpush2.bf16.msra.mxu0 0
    %93 = vmatprep.subr.bf16.mxu0 0
    %94 = vmatpush2.bf16.msra.mxu0 0
    %95 = vmatprep.subr.bf16.mxu0 0
    %96 = vmatpush2.bf16.msra.mxu0 0
    %97 = vmatprep.subr.bf16.mxu0 0
    %98 = vmatpush2.bf16.msra.mxu0 0
    %99 = vmatprep.subr.bf16.mxu0 0
    %100 = vmatpush2.bf16.msra.mxu0 0
    %101 = vmatprep.mubr.bf16.mxu0 0
    %102 = vmatmul.mubr.bf16.gmra.mxu0 %v67
    %v103 = vpop.f32.mrf.mxu0
    %v104 = vadd.f32 0.0, %v103
    %v105 = vpop.f32.mrf.mxu0
    %v106 = vpop.f32.mrf.mxu0
    %v107 = vpop.f32.mrf.mxu0
    %108 = vdwg.mxu0
    %109 = vrot.lane.b32.xlu0 %v104, 64
    %v110 = vpop.permute.xlu0 %109
    %v111 = vmul.f32 %v104, %v104
    %v112 = vmul.f32 %v110, %v110
    %v113 = vadd.f32 %v111, %v112
    %v114 = vmul.f32 %v113, 0.03125
    %v115 = vlaneseq
    %v116 = vand.u32 %v115, 127
    %vm117 = vcmp.lt.s32.totalorder %v116, 16
    %vm118 = vcmp.ge.s32.totalorder %v116, 16
    %vm119 = vcmp.lt.s32.totalorder %v116, 24
    %vm120 = vmand %vm118, %vm119
    %v121 = vsel %vm117, %v114, -1e+30
    %vm122 = vcmask 1043458
    %v123 = vsel %vm122, %v121, -inf
    %124 = vmax.xlane.f32.xlu0 %v123
    %v125 = vpop.xlane.xlu0 %124
    %v126 = vsub.f32 %v121, %v125
    %v127 = vmul.f32 %v126, 1.442695
    %v128 = vpow.pop %v127
    %v129 = vsel %vm122, %v128, 0.0
    %130 = vadd.xlane.f32.xlu0 %v129
    %v131 = vpop.xlane.xlu0 %130
    %v132 = vrcp.pop %v131
    %v133 = vmul.f32 %v128, %v132
    %v135 = vrot.slane %v133, 2
    %v137 = vmul.f32 %v114, %v135
    %vm138 = vcmask 1041408
    %v139 = vsel %vm138, %v137, 0.0
    %140 = vadd.xlane.f32.xlu0 %v139
    %v141 = vpop.xlane.xlu0 %140
    %v142 = vsel %vm120, %v114, -1e+30
    %vm143 = vcmask 1047558
    %v144 = vsel %vm143, %v142, -inf
    %145 = vmax.xlane.f32.xlu0 %v144
    %v146 = vpop.xlane.xlu0 %145
    %v147 = vsub.f32 %v142, %v146
    %v148 = vmul.f32 %v147, 1.442695
    %v149 = vpow.pop %v148
    %v150 = vsel %vm143, %v149, 0.0
    %151 = vadd.xlane.f32.xlu0 %v150
    %v152 = vpop.xlane.xlu0 %151
    %v153 = vrcp.pop %v152
    %v154 = vmul.f32 %v149, %v153
    %v156 = vrot.slane %v154, 2
    %v158 = vmul.f32 %v114, %v156
    %vm159 = vcmask 1045508
    %v160 = vsel %vm159, %v158, 0.0
    %161 = vadd.xlane.f32.xlu0 %v160
    %v162 = vpop.xlane.xlu0 %161
    %v163 = vld [vmem:[%s1] sm:$0x3]
    %vm164 = vcmp.eq.s32.totalorder %v116, 0
    %vm165 = vcmp.eq.s32.totalorder %v116, 1
    %v166 = vsel %vm165, %v162, 0.0
    %v168 = vrot.slane %v166, 4
    %v170 = vsel %vm164, %v141, %v168
    %v171 = vadd.f32 %v163, %v170
    %v172 = vld [vmem:[%s3] sm:$0xff]
    %v173 = vsel %vm138, %v171, 0.0
    %v174 = vrot.slane %v173, 4
    %v175 = vadd.f32 %v173, %v174
    %v176 = vrot.slane %v175, 2
    %v177 = vadd.f32 %v175, %v176
    %v178 = vrot.slane %v177, 1
    %v179 = vadd.f32 %v177, %v178
    %v180 = vrcp.pop 2.0
    %v181 = vmul.f32 %v179, %v180
    %v182 = vmul.f32 %v171, %v171
    %v183 = vsel %vm138, %v182, 0.0
    %v184 = vrot.slane %v183, 4
    %v185 = vadd.f32 %v183, %v184
    %v186 = vrot.slane %v185, 2
    %v187 = vadd.f32 %v185, %v186
    %v188 = vrot.slane %v187, 1
    %v189 = vadd.f32 %v187, %v188
    %v190 = vmul.f32 %v189, %v180
    %v191 = vmul.f32 %v181, %v181
    %v192 = vsub.f32 %v190, %v191
    %v193 = vmax.f32 %v192, 0.0
    %v194 = vsub.f32 %v171, %v181
    %v195 = vadd.f32 %v193, 1e-05
    %v196 = vrsqrt.pop %v195
    %v197 = vmul.f32 %v194, %v196
    %v198 = vlaneseq
    %v199 = vshrl.u32 %v198, 7
    %v200 = vsub.s32 0, %v199
    %v201 = vrot.slane %v172, %v200
    %v202 = vmul.f32 %v197, %v201
    %v203 = vlaneseq
    %v204 = vshrl.u32 %v203, 7
    %v205 = vsub.s32 1, %v204
    %v206 = vrot.slane %v172, %v205
    %v207 = vadd.f32 %v202, %v206
    %v208 = vmax.f32 %v207, 0.0
    %v209 = vld [vmem:[#allocation2 + $0x20] sm:$0xf]
    %v210 = vld [vmem:[#allocation2 + $0x24] sm:$0xf]
    %v211 = vld [vmem:[#allocation2 + $0x28] sm:$0xf]
    %v212 = vld [vmem:[#allocation2 + $0x2c] sm:$0xf]
    %v213 = vld [vmem:[#allocation2 + $0x30] sm:$0xf]
    %v214 = vld [vmem:[#allocation2 + $0x34] sm:$0xf]
    %v215 = vld [vmem:[#allocation2 + $0x38] sm:$0xf]
    %v216 = vld [vmem:[#allocation2 + $0x3c] sm:$0xf]
    %v217 = vld [vmem:[#allocation2 + $0x40] sm:$0xf]
    %v218 = vld [vmem:[#allocation2 + $0x44] sm:$0xf]
    %v219 = vld [vmem:[#allocation2 + $0x48] sm:$0xf]
    %v220 = vld [vmem:[#allocation2 + $0x4c] sm:$0xf]
    %v221 = vld [vmem:[#allocation2 + $0x50] sm:$0xf]
    %v222 = vld [vmem:[#allocation2 + $0x54] sm:$0xf]
    %v223 = vld [vmem:[#allocation2 + $0x58] sm:$0xf]
    %v224 = vld [vmem:[#allocation2 + $0x5c] sm:$0xf]
    %v225 = vpack.c.bf16 %v208, %v208
    %v226 = vlaneseq
    %v227 = vshrl.u32 %v226, 7
    %v228 = vsub.s32 2, %v227
    %v229 = vrot.slane %v172, %v228
    %v246 = vunpack.c.l.b16 %v209
    %v247 = vunpack.c.l.b16 %v210
    %v248 = vunpack.c.l.b16 %v211
    %v249 = vunpack.c.l.b16 %v212
    %v250 = vunpack.c.l.b16 %v213
    %v251 = vunpack.c.l.b16 %v214
    %v252 = vunpack.c.l.b16 %v215
    %v253 = vunpack.c.l.b16 %v216
    %v254 = vunpack.c.l.b16 %v217
    %v255 = vunpack.c.l.b16 %v218
    %v256 = vunpack.c.l.b16 %v219
    %v257 = vunpack.c.l.b16 %v220
    %v258 = vunpack.c.l.b16 %v221
    %v259 = vunpack.c.l.b16 %v222
    %v260 = vunpack.c.l.b16 %v223
    %v261 = vunpack.c.l.b16 %v224
    %v262 = vpack.c.b16 %v247, %v246
    %v263 = vpack.c.b16 %v249, %v248
    %v264 = vpack.c.b16 %v251, %v250
    %v265 = vpack.c.b16 %v253, %v252
    %v266 = vpack.c.b16 %v255, %v254
    %v267 = vpack.c.b16 %v257, %v256
    %v268 = vpack.c.b16 %v259, %v258
    %v269 = vpack.c.b16 %v261, %v260
    %278 = vmatprep.subr.bf16.mxu0 0
    %279 = vmatpush1.bf16.msra.mxu0 %v269
    %280 = vmatprep.subr.bf16.mxu0 0
    %281 = vmatpush1.bf16.msra.mxu0 %v268
    %282 = vmatprep.subr.bf16.mxu0 0
    %283 = vmatpush1.bf16.msra.mxu0 %v267
    %284 = vmatprep.subr.bf16.mxu0 0
    %285 = vmatpush1.bf16.msra.mxu0 %v266
    %286 = vmatprep.subr.bf16.mxu0 0
    %287 = vmatpush1.bf16.msra.mxu0 %v265
    %288 = vmatprep.subr.bf16.mxu0 0
    %289 = vmatpush1.bf16.msra.mxu0 %v264
    %290 = vmatprep.subr.bf16.mxu0 0
    %291 = vmatpush1.bf16.msra.mxu0 %v263
    %292 = vmatprep.subr.bf16.mxu0 0
    %293 = vmatpush1.bf16.msra.mxu0 %v262
    %294 = vmatprep.subr.bf16.mxu0 0
    %295 = vmatpush2.bf16.msra.mxu0 0
    %296 = vmatprep.subr.bf16.mxu0 0
    %297 = vmatpush2.bf16.msra.mxu0 0
    %298 = vmatprep.subr.bf16.mxu0 0
    %299 = vmatpush2.bf16.msra.mxu0 0
    %300 = vmatprep.subr.bf16.mxu0 0
    %301 = vmatpush2.bf16.msra.mxu0 0
    %302 = vmatprep.subr.bf16.mxu0 0
    %303 = vmatpush2.bf16.msra.mxu0 0
    %304 = vmatprep.subr.bf16.mxu0 0
    %305 = vmatpush2.bf16.msra.mxu0 0
    %306 = vmatprep.subr.bf16.mxu0 0
    %307 = vmatpush2.bf16.msra.mxu0 0
    %308 = vmatprep.subr.bf16.mxu0 0
    %309 = vmatpush2.bf16.msra.mxu0 0
    %310 = vmatprep.mubr.bf16.mxu0 0
    %311 = vmatmul.mubr.bf16.gmra.mxu0 %v225
    %v312 = vpop.f32.mrf.mxu0
    %v313 = vadd.f32 %v229, %v312
    %v314 = vpop.f32.mrf.mxu0
    %v315 = vpop.f32.mrf.mxu0
    %v316 = vpop.f32.mrf.mxu0
    %317 = vdwg.mxu0
    %s318 = scalar_lea.vmem %s3, 8
    %v319 = vld [vmem:[%s318] sm:$0xff]
    %v320 = vsel %vm138, %v313, 0.0
    %v321 = vrot.slane %v320, 4
    %v322 = vadd.f32 %v320, %v321
    %v323 = vrot.slane %v322, 2
    %v324 = vadd.f32 %v322, %v323
    %v325 = vrot.slane %v324, 1
    %v326 = vadd.f32 %v324, %v325
    %v327 = vmul.f32 %v326, %v180
    %v328 = vmul.f32 %v313, %v313
    %v329 = vsel %vm138, %v328, 0.0
    %v330 = vrot.slane %v329, 4
    %v331 = vadd.f32 %v329, %v330
    %v332 = vrot.slane %v331, 2
    %v333 = vadd.f32 %v331, %v332
    %v334 = vrot.slane %v333, 1
    %v335 = vadd.f32 %v333, %v334
    %v336 = vmul.f32 %v335, %v180
    %v337 = vmul.f32 %v327, %v327
    %v338 = vsub.f32 %v336, %v337
    %v339 = vmax.f32 %v338, 0.0
    %v340 = vsub.f32 %v313, %v327
    %v341 = vadd.f32 %v339, 1e-05
    %v342 = vrsqrt.pop %v341
    %v343 = vmul.f32 %v340, %v342
    %v344 = vlaneseq
    %v345 = vshrl.u32 %v344, 7
    %v346 = vsub.s32 0, %v345
    %v347 = vrot.slane %v319, %v346
    %v348 = vmul.f32 %v343, %v347
    %v349 = vlaneseq
    %v350 = vshrl.u32 %v349, 7
    %v351 = vsub.s32 1, %v350
    %v352 = vrot.slane %v319, %v351
    %v353 = vadd.f32 %v348, %v352
    %v354 = vmax.f32 %v353, 0.0
    %v355 = vld [vmem:[#allocation2 + $0x60] sm:$0xf]
    %v356 = vld [vmem:[#allocation2 + $0x64] sm:$0xf]
    %v357 = vld [vmem:[#allocation2 + $0x68] sm:$0xf]
    %v358 = vld [vmem:[#allocation2 + $0x6c] sm:$0xf]
    %v359 = vld [vmem:[#allocation2 + $0x70] sm:$0xf]
    %v360 = vld [vmem:[#allocation2 + $0x74] sm:$0xf]
    %v361 = vld [vmem:[#allocation2 + $0x78] sm:$0xf]
    %v362 = vld [vmem:[#allocation2 + $0x7c] sm:$0xf]
    %v363 = vld [vmem:[#allocation2 + $0x80] sm:$0xf]
    %v364 = vld [vmem:[#allocation2 + $0x84] sm:$0xf]
    %v365 = vld [vmem:[#allocation2 + $0x88] sm:$0xf]
    %v366 = vld [vmem:[#allocation2 + $0x8c] sm:$0xf]
    %v367 = vld [vmem:[#allocation2 + $0x90] sm:$0xf]
    %v368 = vld [vmem:[#allocation2 + $0x94] sm:$0xf]
    %v369 = vld [vmem:[#allocation2 + $0x98] sm:$0xf]
    %v370 = vld [vmem:[#allocation2 + $0x9c] sm:$0xf]
    %v371 = vpack.c.bf16 %v354, %v354
    %v372 = vlaneseq
    %v373 = vshrl.u32 %v372, 7
    %v374 = vsub.s32 2, %v373
    %v375 = vrot.slane %v319, %v374
    %v392 = vunpack.c.l.b16 %v355
    %v393 = vunpack.c.l.b16 %v356
    %v394 = vunpack.c.l.b16 %v357
    %v395 = vunpack.c.l.b16 %v358
    %v396 = vunpack.c.l.b16 %v359
    %v397 = vunpack.c.l.b16 %v360
    %v398 = vunpack.c.l.b16 %v361
    %v399 = vunpack.c.l.b16 %v362
    %v400 = vunpack.c.l.b16 %v363
    %v401 = vunpack.c.l.b16 %v364
    %v402 = vunpack.c.l.b16 %v365
    %v403 = vunpack.c.l.b16 %v366
    %v404 = vunpack.c.l.b16 %v367
    %v405 = vunpack.c.l.b16 %v368
    %v406 = vunpack.c.l.b16 %v369
    %v407 = vunpack.c.l.b16 %v370
    %v408 = vpack.c.b16 %v393, %v392
    %v409 = vpack.c.b16 %v395, %v394
    %v410 = vpack.c.b16 %v397, %v396
    %v411 = vpack.c.b16 %v399, %v398
    %v412 = vpack.c.b16 %v401, %v400
    %v413 = vpack.c.b16 %v403, %v402
    %v414 = vpack.c.b16 %v405, %v404
    %v415 = vpack.c.b16 %v407, %v406
    %424 = vmatprep.subr.bf16.mxu0 0
    %425 = vmatpush1.bf16.msra.mxu0 %v415
    %426 = vmatprep.subr.bf16.mxu0 0
    %427 = vmatpush1.bf16.msra.mxu0 %v414
    %428 = vmatprep.subr.bf16.mxu0 0
    %429 = vmatpush1.bf16.msra.mxu0 %v413
    %430 = vmatprep.subr.bf16.mxu0 0
    %431 = vmatpush1.bf16.msra.mxu0 %v412
    %432 = vmatprep.subr.bf16.mxu0 0
    %433 = vmatpush1.bf16.msra.mxu0 %v411
    %434 = vmatprep.subr.bf16.mxu0 0
    %435 = vmatpush1.bf16.msra.mxu0 %v410
    %436 = vmatprep.subr.bf16.mxu0 0
    %437 = vmatpush1.bf16.msra.mxu0 %v409
    %438 = vmatprep.subr.bf16.mxu0 0
    %439 = vmatpush1.bf16.msra.mxu0 %v408
    %440 = vmatprep.subr.bf16.mxu0 0
    %441 = vmatpush2.bf16.msra.mxu0 0
    %442 = vmatprep.subr.bf16.mxu0 0
    %443 = vmatpush2.bf16.msra.mxu0 0
    %444 = vmatprep.subr.bf16.mxu0 0
    %445 = vmatpush2.bf16.msra.mxu0 0
    %446 = vmatprep.subr.bf16.mxu0 0
    %447 = vmatpush2.bf16.msra.mxu0 0
    %448 = vmatprep.subr.bf16.mxu0 0
    %449 = vmatpush2.bf16.msra.mxu0 0
    %450 = vmatprep.subr.bf16.mxu0 0
    %451 = vmatpush2.bf16.msra.mxu0 0
    %452 = vmatprep.subr.bf16.mxu0 0
    %453 = vmatpush2.bf16.msra.mxu0 0
    %454 = vmatprep.subr.bf16.mxu0 0
    %455 = vmatpush2.bf16.msra.mxu0 0
    %456 = vmatprep.mubr.bf16.mxu0 0
    %457 = vmatmul.mubr.bf16.gmra.mxu0 %v371
    %v458 = vpop.f32.mrf.mxu0
    %v459 = vadd.f32 %v375, %v458
    %v460 = vpop.f32.mrf.mxu0
    %v461 = vpop.f32.mrf.mxu0
    %v462 = vpop.f32.mrf.mxu0
    %463 = vdwg.mxu0
    %s464 = scalar_lea.vmem %s3, 16
    %v465 = vld [vmem:[%s464] sm:$0xff]
    %v466 = vsel %vm138, %v459, 0.0
    %v467 = vrot.slane %v466, 4
    %v468 = vadd.f32 %v466, %v467
    %v469 = vrot.slane %v468, 2
    %v470 = vadd.f32 %v468, %v469
    %v471 = vrot.slane %v470, 1
    %v472 = vadd.f32 %v470, %v471
    %v473 = vmul.f32 %v472, %v180
    %v474 = vmul.f32 %v459, %v459
    %v475 = vsel %vm138, %v474, 0.0
    %v476 = vrot.slane %v475, 4
    %v477 = vadd.f32 %v475, %v476
    %v478 = vrot.slane %v477, 2
    %v479 = vadd.f32 %v477, %v478
    %v480 = vrot.slane %v479, 1
    %v481 = vadd.f32 %v479, %v480
    %v482 = vmul.f32 %v481, %v180
    %v483 = vmul.f32 %v473, %v473
    %v484 = vsub.f32 %v482, %v483
    %v485 = vmax.f32 %v484, 0.0
    %v486 = vsub.f32 %v459, %v473
    %v487 = vadd.f32 %v485, 1e-05
    %v488 = vrsqrt.pop %v487
    %v489 = vmul.f32 %v486, %v488
    %v490 = vlaneseq
    %v491 = vshrl.u32 %v490, 7
    %v492 = vsub.s32 0, %v491
    %v493 = vrot.slane %v465, %v492
    %v494 = vmul.f32 %v489, %v493
    %v495 = vlaneseq
    %v496 = vshrl.u32 %v495, 7
    %v497 = vsub.s32 1, %v496
    %v498 = vrot.slane %v465, %v497
    %v499 = vadd.f32 %v494, %v498
    %v500 = vmax.f32 %v499, 0.0
    %v501 = vld [vmem:[#allocation2 + $0xa0] sm:$0xf]
    %v502 = vld [vmem:[#allocation2 + $0xa4] sm:$0xf]
    %v503 = vld [vmem:[#allocation2 + $0xa8] sm:$0xf]
    %v504 = vld [vmem:[#allocation2 + $0xac] sm:$0xf]
    %v505 = vld [vmem:[#allocation2 + $0xb0] sm:$0xf]
    %v506 = vld [vmem:[#allocation2 + $0xb4] sm:$0xf]
    %v507 = vld [vmem:[#allocation2 + $0xb8] sm:$0xf]
    %v508 = vld [vmem:[#allocation2 + $0xbc] sm:$0xf]
    %v509 = vld [vmem:[#allocation2 + $0xc0] sm:$0xf]
    %v510 = vld [vmem:[#allocation2 + $0xc4] sm:$0xf]
    %v511 = vld [vmem:[#allocation2 + $0xc8] sm:$0xf]
    %v512 = vld [vmem:[#allocation2 + $0xcc] sm:$0xf]
    %v513 = vld [vmem:[#allocation2 + $0xd0] sm:$0xf]
    %v514 = vld [vmem:[#allocation2 + $0xd4] sm:$0xf]
    %v515 = vld [vmem:[#allocation2 + $0xd8] sm:$0xf]
    %v516 = vld [vmem:[#allocation2 + $0xdc] sm:$0xf]
    %v517 = vpack.c.bf16 %v500, %v500
    %v518 = vlaneseq
    %v519 = vshrl.u32 %v518, 7
    %v520 = vsub.s32 2, %v519
    %v521 = vrot.slane %v465, %v520
    %v538 = vunpack.c.l.b16 %v501
    %v539 = vunpack.c.l.b16 %v502
    %v540 = vunpack.c.l.b16 %v503
    %v541 = vunpack.c.l.b16 %v504
    %v542 = vunpack.c.l.b16 %v505
    %v543 = vunpack.c.l.b16 %v506
    %v544 = vunpack.c.l.b16 %v507
    %v545 = vunpack.c.l.b16 %v508
    %v546 = vunpack.c.l.b16 %v509
    %v547 = vunpack.c.l.b16 %v510
    %v548 = vunpack.c.l.b16 %v511
    %v549 = vunpack.c.l.b16 %v512
    %v550 = vunpack.c.l.b16 %v513
    %v551 = vunpack.c.l.b16 %v514
    %v552 = vunpack.c.l.b16 %v515
    %v553 = vunpack.c.l.b16 %v516
    %v554 = vpack.c.b16 %v539, %v538
    %v555 = vpack.c.b16 %v541, %v540
    %v556 = vpack.c.b16 %v543, %v542
    %v557 = vpack.c.b16 %v545, %v544
    %v558 = vpack.c.b16 %v547, %v546
    %v559 = vpack.c.b16 %v549, %v548
    %v560 = vpack.c.b16 %v551, %v550
    %v561 = vpack.c.b16 %v553, %v552
    %570 = vmatprep.subr.bf16.mxu0 0
    %571 = vmatpush1.bf16.msra.mxu0 %v561
    %572 = vmatprep.subr.bf16.mxu0 0
    %573 = vmatpush1.bf16.msra.mxu0 %v560
    %574 = vmatprep.subr.bf16.mxu0 0
    %575 = vmatpush1.bf16.msra.mxu0 %v559
    %576 = vmatprep.subr.bf16.mxu0 0
    %577 = vmatpush1.bf16.msra.mxu0 %v558
    %578 = vmatprep.subr.bf16.mxu0 0
    %579 = vmatpush1.bf16.msra.mxu0 %v557
    %580 = vmatprep.subr.bf16.mxu0 0
    %581 = vmatpush1.bf16.msra.mxu0 %v556
    %582 = vmatprep.subr.bf16.mxu0 0
    %583 = vmatpush1.bf16.msra.mxu0 %v555
    %584 = vmatprep.subr.bf16.mxu0 0
    %585 = vmatpush1.bf16.msra.mxu0 %v554
    %586 = vmatprep.subr.bf16.mxu0 0
    %587 = vmatpush2.bf16.msra.mxu0 0
    %588 = vmatprep.subr.bf16.mxu0 0
    %589 = vmatpush2.bf16.msra.mxu0 0
    %590 = vmatprep.subr.bf16.mxu0 0
    %591 = vmatpush2.bf16.msra.mxu0 0
    %592 = vmatprep.subr.bf16.mxu0 0
    %593 = vmatpush2.bf16.msra.mxu0 0
    %594 = vmatprep.subr.bf16.mxu0 0
    %595 = vmatpush2.bf16.msra.mxu0 0
    %596 = vmatprep.subr.bf16.mxu0 0
    %597 = vmatpush2.bf16.msra.mxu0 0
    %598 = vmatprep.subr.bf16.mxu0 0
    %599 = vmatpush2.bf16.msra.mxu0 0
    %600 = vmatprep.subr.bf16.mxu0 0
    %601 = vmatpush2.bf16.msra.mxu0 0
    %602 = vmatprep.mubr.bf16.mxu0 0
    %603 = vmatmul.mubr.bf16.gmra.mxu0 %v517
    %v604 = vpop.f32.mrf.mxu0
    %v605 = vadd.f32 %v521, %v604
    %v606 = vpop.f32.mrf.mxu0
    %v607 = vpop.f32.mrf.mxu0
    %v608 = vpop.f32.mrf.mxu0
    %609 = vdwg.mxu0
    %s610 = scalar_lea.vmem %s3, 24
    %v611 = vld [vmem:[%s610] sm:$0xff]
    %v612 = vsel %vm138, %v605, 0.0
    %v613 = vrot.slane %v612, 4
    %v614 = vadd.f32 %v612, %v613
    %v615 = vrot.slane %v614, 2
    %v616 = vadd.f32 %v614, %v615
    %v617 = vrot.slane %v616, 1
    %v618 = vadd.f32 %v616, %v617
    %v619 = vmul.f32 %v618, %v180
    %v620 = vmul.f32 %v605, %v605
    %v621 = vsel %vm138, %v620, 0.0
    %v622 = vrot.slane %v621, 4
    %v623 = vadd.f32 %v621, %v622
    %v624 = vrot.slane %v623, 2
    %v625 = vadd.f32 %v623, %v624
    %v626 = vrot.slane %v625, 1
    %v627 = vadd.f32 %v625, %v626
    %v628 = vmul.f32 %v627, %v180
    %v629 = vmul.f32 %v619, %v619
    %v630 = vsub.f32 %v628, %v629
    %v631 = vmax.f32 %v630, 0.0
    %v632 = vsub.f32 %v605, %v619
    %v633 = vadd.f32 %v631, 1e-05
    %v634 = vrsqrt.pop %v633
    %v635 = vmul.f32 %v632, %v634
    %v636 = vlaneseq
    %v637 = vshrl.u32 %v636, 7
    %v638 = vsub.s32 0, %v637
    %v639 = vrot.slane %v611, %v638
    %v640 = vmul.f32 %v635, %v639
    %v641 = vlaneseq
    %v642 = vshrl.u32 %v641, 7
    %v643 = vsub.s32 1, %v642
    %v644 = vrot.slane %v611, %v643
    %v645 = vadd.f32 %v640, %v644
    %v646 = vmax.f32 %v645, 0.0
    %v647 = vld [vmem:[#allocation2 + $0xe0] sm:$0xf]
    %v648 = vld [vmem:[#allocation2 + $0xe4] sm:$0xf]
    %v649 = vld [vmem:[#allocation2 + $0xe8] sm:$0xf]
    %v650 = vld [vmem:[#allocation2 + $0xec] sm:$0xf]
    %v651 = vld [vmem:[#allocation2 + $0xf0] sm:$0xf]
    %v652 = vld [vmem:[#allocation2 + $0xf4] sm:$0xf]
    %v653 = vld [vmem:[#allocation2 + $0xf8] sm:$0xf]
    %v654 = vld [vmem:[#allocation2 + $0xfc] sm:$0xf]
    %v655 = vld [vmem:[#allocation2 + $0x100] sm:$0xf]
    %v656 = vld [vmem:[#allocation2 + $0x104] sm:$0xf]
    %v657 = vld [vmem:[#allocation2 + $0x108] sm:$0xf]
    %v658 = vld [vmem:[#allocation2 + $0x10c] sm:$0xf]
    %v659 = vld [vmem:[#allocation2 + $0x110] sm:$0xf]
    %v660 = vld [vmem:[#allocation2 + $0x114] sm:$0xf]
    %v661 = vld [vmem:[#allocation2 + $0x118] sm:$0xf]
    %v662 = vld [vmem:[#allocation2 + $0x11c] sm:$0xf]
    %v663 = vpack.c.bf16 %v646, %v646
    %v664 = vlaneseq
    %v665 = vshrl.u32 %v664, 7
    %v666 = vsub.s32 2, %v665
    %v667 = vrot.slane %v611, %v666
    %v684 = vunpack.c.l.b16 %v647
    %v685 = vunpack.c.l.b16 %v648
    %v686 = vunpack.c.l.b16 %v649
    %v687 = vunpack.c.l.b16 %v650
    %v688 = vunpack.c.l.b16 %v651
    %v689 = vunpack.c.l.b16 %v652
    %v690 = vunpack.c.l.b16 %v653
    %v691 = vunpack.c.l.b16 %v654
    %v692 = vunpack.c.l.b16 %v655
    %v693 = vunpack.c.l.b16 %v656
    %v694 = vunpack.c.l.b16 %v657
    %v695 = vunpack.c.l.b16 %v658
    %v696 = vunpack.c.l.b16 %v659
    %v697 = vunpack.c.l.b16 %v660
    %v698 = vunpack.c.l.b16 %v661
    %v699 = vunpack.c.l.b16 %v662
    %v700 = vpack.c.b16 %v685, %v684
    %v701 = vpack.c.b16 %v687, %v686
    %v702 = vpack.c.b16 %v689, %v688
    %v703 = vpack.c.b16 %v691, %v690
    %v704 = vpack.c.b16 %v693, %v692
    %v705 = vpack.c.b16 %v695, %v694
    %v706 = vpack.c.b16 %v697, %v696
    %v707 = vpack.c.b16 %v699, %v698
    %716 = vmatprep.subr.bf16.mxu0 0
    %717 = vmatpush1.bf16.msra.mxu0 %v707
    %718 = vmatprep.subr.bf16.mxu0 0
    %719 = vmatpush1.bf16.msra.mxu0 %v706
    %720 = vmatprep.subr.bf16.mxu0 0
    %721 = vmatpush1.bf16.msra.mxu0 %v705
    %722 = vmatprep.subr.bf16.mxu0 0
    %723 = vmatpush1.bf16.msra.mxu0 %v704
    %724 = vmatprep.subr.bf16.mxu0 0
    %725 = vmatpush1.bf16.msra.mxu0 %v703
    %726 = vmatprep.subr.bf16.mxu0 0
    %727 = vmatpush1.bf16.msra.mxu0 %v702
    %728 = vmatprep.subr.bf16.mxu0 0
    %729 = vmatpush1.bf16.msra.mxu0 %v701
    %730 = vmatprep.subr.bf16.mxu0 0
    %731 = vmatpush1.bf16.msra.mxu0 %v700
    %732 = vmatprep.subr.bf16.mxu0 0
    %733 = vmatpush2.bf16.msra.mxu0 0
    %734 = vmatprep.subr.bf16.mxu0 0
    %735 = vmatpush2.bf16.msra.mxu0 0
    %736 = vmatprep.subr.bf16.mxu0 0
    %737 = vmatpush2.bf16.msra.mxu0 0
    %738 = vmatprep.subr.bf16.mxu0 0
    %739 = vmatpush2.bf16.msra.mxu0 0
    %740 = vmatprep.subr.bf16.mxu0 0
    %741 = vmatpush2.bf16.msra.mxu0 0
    %742 = vmatprep.subr.bf16.mxu0 0
    %743 = vmatpush2.bf16.msra.mxu0 0
    %744 = vmatprep.subr.bf16.mxu0 0
    %745 = vmatpush2.bf16.msra.mxu0 0
    %746 = vmatprep.subr.bf16.mxu0 0
    %747 = vmatpush2.bf16.msra.mxu0 0
    %748 = vmatprep.mubr.bf16.mxu0 0
    %749 = vmatmul.mubr.bf16.gmra.mxu0 %v663
    %v750 = vpop.f32.mrf.mxu0
    %v751 = vadd.f32 %v667, %v750
    %v752 = vpop.f32.mrf.mxu0
    %v753 = vpop.f32.mrf.mxu0
    %v754 = vpop.f32.mrf.mxu0
    %755 = vdwg.mxu0
    %v756 = vld [vmem:[#allocation2 + $0x120] sm:$0xf]
    %v757 = vld [vmem:[#allocation2 + $0x124] sm:$0xf]
    %v758 = vld [vmem:[#allocation2 + $0x128] sm:$0xf]
    %v759 = vld [vmem:[#allocation2 + $0x12c] sm:$0xf]
    %v760 = vld [vmem:[#allocation2 + $0x130] sm:$0xf]
    %v761 = vld [vmem:[#allocation2 + $0x134] sm:$0xf]
    %v762 = vld [vmem:[#allocation2 + $0x138] sm:$0xf]
    %v763 = vld [vmem:[#allocation2 + $0x13c] sm:$0xf]
    %v764 = vld [vmem:[#allocation2 + $0x140] sm:$0xf]
    %v765 = vld [vmem:[#allocation2 + $0x144] sm:$0xf]
    %v766 = vld [vmem:[#allocation2 + $0x148] sm:$0xf]
    %v767 = vld [vmem:[#allocation2 + $0x14c] sm:$0xf]
    %v768 = vld [vmem:[#allocation2 + $0x150] sm:$0xf]
    %v769 = vld [vmem:[#allocation2 + $0x154] sm:$0xf]
    %v770 = vld [vmem:[#allocation2 + $0x158] sm:$0xf]
    %v771 = vld [vmem:[#allocation2 + $0x15c] sm:$0xf]
    %v772 = vpack.c.bf16 %v751, %v751
    %s773 = scalar_lea.vmem %s3, 32
    %v774 = vld [vmem:[%s773] sm:$0xff]
    %v775 = vlaneseq
    %v776 = vshrl.u32 %v775, 7
    %v777 = vsub.s32 2, %v776
    %v778 = vrot.slane %v774, %v777
    %v795 = vunpack.c.l.b16 %v756
    %v796 = vunpack.c.l.b16 %v757
    %v797 = vunpack.c.l.b16 %v758
    %v798 = vunpack.c.l.b16 %v759
    %v799 = vunpack.c.l.b16 %v760
    %v800 = vunpack.c.l.b16 %v761
    %v801 = vunpack.c.l.b16 %v762
    %v802 = vunpack.c.l.b16 %v763
    %v803 = vunpack.c.l.b16 %v764
    %v804 = vunpack.c.l.b16 %v765
    %v805 = vunpack.c.l.b16 %v766
    %v806 = vunpack.c.l.b16 %v767
    %v807 = vunpack.c.l.b16 %v768
    %v808 = vunpack.c.l.b16 %v769
    %v809 = vunpack.c.l.b16 %v770
    %v810 = vunpack.c.l.b16 %v771
    %v811 = vpack.c.b16 %v796, %v795
    %v812 = vpack.c.b16 %v798, %v797
    %v813 = vpack.c.b16 %v800, %v799
    %v814 = vpack.c.b16 %v802, %v801
    %v815 = vpack.c.b16 %v804, %v803
    %v816 = vpack.c.b16 %v806, %v805
    %v817 = vpack.c.b16 %v808, %v807
    %v818 = vpack.c.b16 %v810, %v809
    %827 = vmatprep.subr.bf16.mxu0 0
    %828 = vmatpush1.bf16.msra.mxu0 %v818
    %829 = vmatprep.subr.bf16.mxu0 0
    %830 = vmatpush1.bf16.msra.mxu0 %v817
    %831 = vmatprep.subr.bf16.mxu0 0
    %832 = vmatpush1.bf16.msra.mxu0 %v816
    %833 = vmatprep.subr.bf16.mxu0 0
    %834 = vmatpush1.bf16.msra.mxu0 %v815
    %835 = vmatprep.subr.bf16.mxu0 0
    %836 = vmatpush1.bf16.msra.mxu0 %v814
    %837 = vmatprep.subr.bf16.mxu0 0
    %838 = vmatpush1.bf16.msra.mxu0 %v813
    %839 = vmatprep.subr.bf16.mxu0 0
    %840 = vmatpush1.bf16.msra.mxu0 %v812
    %841 = vmatprep.subr.bf16.mxu0 0
    %842 = vmatpush1.bf16.msra.mxu0 %v811
    %843 = vmatprep.subr.bf16.mxu0 0
    %844 = vmatpush2.bf16.msra.mxu0 0
    %845 = vmatprep.subr.bf16.mxu0 0
    %846 = vmatpush2.bf16.msra.mxu0 0
    %847 = vmatprep.subr.bf16.mxu0 0
    %848 = vmatpush2.bf16.msra.mxu0 0
    %849 = vmatprep.subr.bf16.mxu0 0
    %850 = vmatpush2.bf16.msra.mxu0 0
    %851 = vmatprep.subr.bf16.mxu0 0
    %852 = vmatpush2.bf16.msra.mxu0 0
    %853 = vmatprep.subr.bf16.mxu0 0
    %854 = vmatpush2.bf16.msra.mxu0 0
    %855 = vmatprep.subr.bf16.mxu0 0
    %856 = vmatpush2.bf16.msra.mxu0 0
    %857 = vmatprep.subr.bf16.mxu0 0
    %858 = vmatpush2.bf16.msra.mxu0 0
    %859 = vmatprep.mubr.bf16.mxu0 0
    %860 = vmatmul.mubr.bf16.gmra.mxu0 %v772
    %v861 = vpop.f32.mrf.mxu0
    %v862 = vadd.f32 %v778, %v861
    %v863 = vpop.f32.mrf.mxu0
    %v864 = vpop.f32.mrf.mxu0
    %v865 = vpop.f32.mrf.mxu0
    %866 = vdwg.mxu0
    %867 = vst [vmem:[%s4] sm:$0x3] %v862
    %868 = vst [vmem:[%s4 + $0x2] sm:$0x3] %v171
    // Predicated region
    $region22: #{cardioresp_forward.1} parent=1 // pred_check
      _
    $region23: #{cardioresp_forward.1} parent=1 // pred_check_branch
      %870 = sbr.rel (0) target = $region25
    $region24: #{cardioresp_forward.1} parent=1 // pred_region
      _
    $region25: #{cardioresp_forward.1} parent=1 // pred_fallthru
      _
    // Predicated region
    $region26: #{cardioresp_forward.1} parent=1 // pred_check
      _
    $region27: #{cardioresp_forward.1} parent=1 // pred_check_branch
      %872 = sbr.rel (0) target = $region29
    $region28: #{cardioresp_forward.1} parent=1 // pred_region
      _
    $region29: #{cardioresp_forward.1} parent=1 // pred_fallthru
      _
    %873 = vsyncpa [#allocation3], 1

</llo_original>
